<compile_context>
chip_gen: v6e
topology: v6e:2x2x1
jax: 0.10.0
libtpu: 0.0.40
codegen_flags: <defaults>
</compile_context>

<pallas_src>
import functools

import jax
import jax.numpy as jnp
from jax.experimental import pallas as pl
from jax.experimental.pallas import tpu as pltpu


def _attention_kernel(x_ref, g_ref, b_ref, wqkv_ref, wo_ref, bo_ref, o_ref, *,
                      heads, dim_head):
    """One grid step = one batch block (all heads handled in-kernel)."""
    blk_b, n_tok, d_model = x_ref.shape
    inner = heads * dim_head
    m = blk_b * n_tok

    # ---- LayerNorm (f32 math, biased variance, affine) ----
    x = x_ref[...].astype(jnp.float32).reshape(m, d_model)
    mean = jnp.mean(x, axis=-1, keepdims=True)
    var = jnp.mean(jnp.square(x - mean), axis=-1, keepdims=True)
    xn = (x - mean) * jax.lax.rsqrt(var + 1e-5)
    xn = (xn * g_ref[...] + b_ref[...]).astype(jnp.bfloat16)          # (m, D)

    # ---- fused QKV projection: one wide MXU matmul (scale folded into W_q) ----
    qkv = jnp.dot(xn, wqkv_ref[...],
                  preferred_element_type=jnp.float32)                 # (m, 3*inner)
    qkv = qkv.reshape(blk_b, n_tok, 3 * inner)

    # ---- per-head attention (static in-kernel loop; heads is small) ----
    head_outs = []
    for h in range(heads):
        lo = h * dim_head
        q = qkv[:, :, lo:lo + dim_head].astype(jnp.bfloat16)
        k = qkv[:, :, inner + lo:inner + lo + dim_head].astype(jnp.bfloat16)
        v = qkv[:, :, 2 * inner + lo:2 * inner + lo + dim_head].astype(jnp.bfloat16)

        # scores: contract last dims, no explicit transpose; f32 softmax
        s = jnp.einsum('bnd,bmd->bnm', q, k,
                       preferred_element_type=jnp.float32)            # (blk_b, N, N)
        s = s - jnp.max(s, axis=-1, keepdims=True)
        p = jnp.exp(s)
        p = p * pl.reciprocal(jnp.sum(p, axis=-1, keepdims=True), approx=True)

        ho = jnp.einsum('bnm,bmd->bnd', p.astype(jnp.bfloat16), v,
                        preferred_element_type=jnp.float32)           # (blk_b, N, dh)
        head_outs.append(ho.astype(jnp.bfloat16))

    # merge heads along lanes, then ONE full-depth output projection + bias
    out_heads = jnp.concatenate(head_outs, axis=-1).reshape(m, inner)  # bf16
    y = jnp.dot(out_heads, wo_ref[...], preferred_element_type=jnp.float32)
    y = y + bo_ref[...]                                                # (m, D) f32
    o_ref[...] = y.reshape(blk_b, n_tok, d_model).astype(o_ref.dtype)


def _pick_block_b(batch, n_tok, max_tokens=1024):
    """Largest divisor of `batch` with <= max_tokens tokens per block.

    If N is not a multiple of 8, force blk_b=1 so the in-kernel
    (blk_b, N, D) <-> (blk_b*N, D) reshapes never merge across an unaligned
    sublane boundary (no hidden relayout copies)."""
    if n_tok % 8 != 0:
        return 1
    best = 1
    for cand in range(1, batch + 1):
        if batch % cand == 0 and cand * n_tok <= max_tokens:
            best = cand
    return best


def attention_forward(x, gamma, beta, w_qkv, w_out, b_out, *, heads, dim_head):
    B, N, D = x.shape
    inner = heads * dim_head
    assert w_qkv.shape == (D, 3 * inner)
    assert w_out.shape == (inner, D)
    scale = float(dim_head) ** -0.5

    # --- one-time weight prep (outside the kernel): fold the softmax scale
    #     into the q columns of the fused qkv weight; cast weights to bf16. ---
    wqkv_scaled = jnp.concatenate([w_qkv[:, :inner] * scale, w_qkv[:, inner:]],
                                  axis=-1)
    wqkv_bf = wqkv_scaled.astype(jnp.bfloat16)                 # (D, 3*inner)
    wo_bf = w_out.astype(jnp.bfloat16)                         # (inner, D)

    gamma2 = gamma.reshape(1, D).astype(jnp.float32)
    beta2 = beta.reshape(1, D).astype(jnp.float32)
    bout2 = b_out.reshape(1, D).astype(jnp.float32)

    blk_b = _pick_block_b(B, N)
    grid = (B // blk_b,)

    kernel = functools.partial(_attention_kernel, heads=heads, dim_head=dim_head)

    return pl.pallas_call(
        kernel,
        out_shape=jax.ShapeDtypeStruct((B, N, D), x.dtype),
        grid_spec=pltpu.PrefetchScalarGridSpec(
            num_scalar_prefetch=0,
            grid=grid,
            in_specs=[
                pl.BlockSpec((blk_b, N, D), lambda b: (b, 0, 0)),   # x block
                pl.BlockSpec((1, D), lambda b: (0, 0)),             # ln gamma
                pl.BlockSpec((1, D), lambda b: (0, 0)),             # ln beta
                pl.BlockSpec((D, 3 * inner), lambda b: (0, 0)),     # fused W_qkv (resident)
                pl.BlockSpec((inner, D), lambda b: (0, 0)),         # W_out (resident)
                pl.BlockSpec((1, D), lambda b: (0, 0)),             # b_out
            ],
            out_specs=pl.BlockSpec((blk_b, N, D), lambda b: (b, 0, 0)),
        ),
        compiler_params=pltpu.CompilerParams(
            # batch blocks are independent -> shard across TensorCores where
            # the hardware has more than one (v7x); no-op / harmless on 1-TC.
            dimension_semantics=("parallel",),
            # plenty for these tiles; stays under v7x's 64 MiB physical VMEM.
            vmem_limit_bytes=48 * 1024 * 1024,
        ),
    )(x, gamma2, beta2, wqkv_bf, wo_bf, bout2)


def _reference(x, gamma, beta, w_qkv, w_out, b_out, *, heads, dim_head):
    """Pure-JAX f32 reference mirroring the PyTorch forward."""
    B, N, D = x.shape
    inner = heads * dim_head
    mean = jnp.mean(x, axis=-1, keepdims=True)
    var = jnp.mean((x - mean) ** 2, axis=-1, keepdims=True)
    xn = (x - mean) / jnp.sqrt(var + 1e-5) * gamma[0] + beta[0]
    qkv = xn @ w_qkv                                        # (B, N, 3*inner)
    q, k, v = jnp.split(qkv, 3, axis=-1)

    def to_heads(t):  # b n (h d) -> b h n d
        return t.reshape(B, N, heads, dim_head).transpose(0, 2, 1, 3)

    q, k, v = map(to_heads, (q, k, v))
    dots = jnp.einsum('bhnd,bhmd->bhnm', q, k) * (dim_head ** -0.5)
    attn = jax.nn.softmax(dots, axis=-1)
    out = jnp.einsum('bhnm,bhmd->bhnd', attn, v)
    out = out.transpose(0, 2, 1, 3).reshape(B, N, inner)
    return out @ w_out + b_out[0]


if __name__ == "__main__":
    # Small shapes consistent with the module's forward.
    B, N, D = 2, 8, 32
    heads, dim_head = 4, 16
    inner = heads * dim_head  # 64; project_out=True since heads != 1

    key = jax.random.PRNGKey(0)
    kx, kg, kb, kq, kw, kc = jax.random.split(key, 6)

    x = jax.random.normal(kx, (B, N, D), dtype=jnp.float32)
    gamma = 1.0 + 0.1 * jax.random.normal(kg, (1, D), dtype=jnp.float32)
    beta = 0.1 * jax.random.normal(kb, (1, D), dtype=jnp.float32)
    # Weights stored pre-transposed (in_features, out_features) so the kernel
    # does y = x @ W directly (PyTorch Linear computes x @ W.T).
    w_qkv = 0.1 * jax.random.normal(kq, (D, 3 * inner), dtype=jnp.float32)
    w_out = 0.1 * jax.random.normal(kw, (inner, D), dtype=jnp.float32)
    b_out = 0.1 * jax.random.normal(kc, (1, D), dtype=jnp.float32)

    y = attention_forward(x, gamma, beta, w_qkv, w_out, b_out,
                          heads=heads, dim_head=dim_head)
    y = jax.block_until_ready(y)

    y_ref = _reference(x, gamma, beta, w_qkv, w_out, b_out,
                       heads=heads, dim_head=dim_head)
    assert y.shape == (B, N, D)
    # bf16 MXU operands (f32 accumulation) -> tolerance loosened vs pure f32.
    assert jnp.allclose(y, y_ref, atol=2e-2, rtol=2e-2), "mismatch vs reference"

    print("KERNEL_OK")
</pallas_src>

<mosaic_0001>
module attributes {stable_mosaic.version = 11 : i64} {
  func.func @_attention_kernel(%arg0: i32, %arg1: memref<2x8x32xf32, #tpu.memory_space<vmem>>, %arg2: memref<1x32xf32, #tpu.memory_space<vmem>>, %arg3: memref<1x32xf32, #tpu.memory_space<vmem>>, %arg4: memref<32x192xbf16, #tpu.memory_space<vmem>>, %arg5: memref<64x32xbf16, #tpu.memory_space<vmem>>, %arg6: memref<1x32xf32, #tpu.memory_space<vmem>>, %arg7: memref<2x8x32xf32, #tpu.memory_space<vmem>>) attributes {dimension_semantics = [#tpu.dimension_semantics<parallel>], iteration_bounds = array<i64: 1>, scalar_prefetch = 0 : i64, scratch_operands = 0 : i64, tpu.core_type = #tpu.core_type<tc>, window_params = [{transform_indices = @transform_0, window_bounds = array<i64: 2, 8, 32>}, {pipeline_mode = #tpu.pipeline_mode<synchronous>, transform_indices = @transform_1, window_bounds = array<i64: 1, 32>}, {pipeline_mode = #tpu.pipeline_mode<synchronous>, transform_indices = @transform_2, window_bounds = array<i64: 1, 32>}, {pipeline_mode = #tpu.pipeline_mode<synchronous>, transform_indices = @transform_3, window_bounds = array<i64: 32, 192>}, {pipeline_mode = #tpu.pipeline_mode<synchronous>, transform_indices = @transform_4, window_bounds = array<i64: 64, 32>}, {pipeline_mode = #tpu.pipeline_mode<synchronous>, transform_indices = @transform_5, window_bounds = array<i64: 1, 32>}, {transform_indices = @transform_6, window_bounds = array<i64: 2, 8, 32>}]} {
    %c0 = arith.constant 0 : index
    %c0_0 = arith.constant 0 : index
    %c0_1 = arith.constant 0 : index
    %0 = vector.load %arg1[%c0, %c0_0, %c0_1] : memref<2x8x32xf32, #tpu.memory_space<vmem>>, vector<2x8x32xf32>
    %1 = vector.shape_cast %0 : vector<2x8x32xf32> to vector<16x32xf32>
    %cst = arith.constant dense<0.000000e+00> : vector<16xf32>
    %2 = vector.multi_reduction <add>, %1, %cst [1] : vector<16x32xf32> to vector<16xf32>
    %3 = vector.shape_cast %2 : vector<16xf32> to vector<16x1xf32>
    %cst_2 = arith.constant 3.200000e+01 : f32
    %4 = vector.broadcast %cst_2 : f32 to vector<16x1xf32>
    %5 = arith.divf %3, %4 : vector<16x1xf32>
    %6 = vector.broadcast %5 : vector<16x1xf32> to vector<16x32xf32>
    %7 = arith.subf %1, %6 : vector<16x32xf32>
    %8 = arith.mulf %7, %7 : vector<16x32xf32>
    %cst_3 = arith.constant dense<0.000000e+00> : vector<16xf32>
    %9 = vector.multi_reduction <add>, %8, %cst_3 [1] : vector<16x32xf32> to vector<16xf32>
    %10 = vector.shape_cast %9 : vector<16xf32> to vector<16x1xf32>
    %cst_4 = arith.constant 3.200000e+01 : f32
    %11 = vector.broadcast %cst_4 : f32 to vector<16x1xf32>
    %12 = arith.divf %10, %11 : vector<16x1xf32>
    %13 = vector.broadcast %5 : vector<16x1xf32> to vector<16x32xf32>
    %14 = arith.subf %1, %13 : vector<16x32xf32>
    %cst_5 = arith.constant 9.99999974E-6 : f32
    %15 = vector.broadcast %cst_5 : f32 to vector<16x1xf32>
    %16 = arith.addf %12, %15 : vector<16x1xf32>
    %17 = math.rsqrt %16 : vector<16x1xf32>
    %18 = vector.broadcast %17 : vector<16x1xf32> to vector<16x32xf32>
    %19 = arith.mulf %14, %18 : vector<16x32xf32>
    %c0_6 = arith.constant 0 : index
    %c0_7 = arith.constant 0 : index
    %20 = vector.load %arg2[%c0_6, %c0_7] : memref<1x32xf32, #tpu.memory_space<vmem>>, vector<1x32xf32>
    %21 = vector.broadcast %20 : vector<1x32xf32> to vector<16x32xf32>
    %22 = arith.mulf %19, %21 : vector<16x32xf32>
    %c0_8 = arith.constant 0 : index
    %c0_9 = arith.constant 0 : index
    %23 = vector.load %arg3[%c0_8, %c0_9] : memref<1x32xf32, #tpu.memory_space<vmem>>, vector<1x32xf32>
    %24 = vector.broadcast %23 : vector<1x32xf32> to vector<16x32xf32>
    %25 = arith.addf %22, %24 : vector<16x32xf32>
    %26 = arith.truncf %25 : vector<16x32xf32> to vector<16x32xbf16>
    %c0_10 = arith.constant 0 : index
    %c0_11 = arith.constant 0 : index
    %27 = vector.load %arg4[%c0_10, %c0_11] : memref<32x192xbf16, #tpu.memory_space<vmem>>, vector<32x192xbf16>
    %cst_12 = arith.constant dense<0.000000e+00> : vector<16x192xf32>
    %28 = tpu.matmul %26, %27, %cst_12 {dimension_numbers = #tpu.dot_dimension_numbers<[1], [0], [0], [1], [0, 0, 1, 1], [], []>} : vector<16x32xbf16>, vector<32x192xbf16>, vector<16x192xf32> -> vector<16x192xf32>
    %29 = vector.shape_cast %28 : vector<16x192xf32> to vector<2x8x192xf32>
    %30 = vector.extract_strided_slice %29 {offsets = [0, 0, 0], sizes = [2, 8, 16], strides = [1, 1, 1]} : vector<2x8x192xf32> to vector<2x8x16xf32>
    %31 = arith.truncf %30 : vector<2x8x16xf32> to vector<2x8x16xbf16>
    %32 = vector.extract_strided_slice %29 {offsets = [0, 0, 64], sizes = [2, 8, 16], strides = [1, 1, 1]} : vector<2x8x192xf32> to vector<2x8x16xf32>
    %33 = arith.truncf %32 : vector<2x8x16xf32> to vector<2x8x16xbf16>
    %34 = vector.extract_strided_slice %29 {offsets = [0, 0, 128], sizes = [2, 8, 16], strides = [1, 1, 1]} : vector<2x8x192xf32> to vector<2x8x16xf32>
    %35 = arith.truncf %34 : vector<2x8x16xf32> to vector<2x8x16xbf16>
    "tpu.trace_start"() <{level = 10 : i32, message = "bnd,bmd->bnm"}> : () -> ()
    %cst_13 = arith.constant dense<0.000000e+00> : vector<2x8x8xf32>
    %36 = tpu.matmul %31, %33, %cst_13 {dimension_numbers = #tpu.dot_dimension_numbers<[2], [2], [1], [1], [0, 0, 0, 1, 1, 1], [0], [0]>} : vector<2x8x16xbf16>, vector<2x8x16xbf16>, vector<2x8x8xf32> -> vector<2x8x8xf32>
    "tpu.trace_stop"() : () -> ()
    %cst_14 = arith.constant dense<0xFF800000> : vector<2x8xf32>
    %37 = vector.multi_reduction <maximumf>, %36, %cst_14 [2] : vector<2x8x8xf32> to vector<2x8xf32>
    %38 = vector.shape_cast %37 : vector<2x8xf32> to vector<2x8x1xf32>
    %39 = vector.broadcast %38 : vector<2x8x1xf32> to vector<2x8x8xf32>
    %40 = arith.subf %36, %39 : vector<2x8x8xf32>
    %41 = math.exp %40 : vector<2x8x8xf32>
    %cst_15 = arith.constant dense<0.000000e+00> : vector<2x8xf32>
    %42 = vector.multi_reduction <add>, %41, %cst_15 [2] : vector<2x8x8xf32> to vector<2x8xf32>
    %43 = vector.shape_cast %42 : vector<2x8xf32> to vector<2x8x1xf32>
    %44 = tpu.reciprocal %43 {approx = true} : vector<2x8x1xf32> -> vector<2x8x1xf32>
    %45 = vector.broadcast %44 : vector<2x8x1xf32> to vector<2x8x8xf32>
    %46 = arith.mulf %41, %45 : vector<2x8x8xf32>
    %47 = arith.truncf %46 : vector<2x8x8xf32> to vector<2x8x8xbf16>
    "tpu.trace_start"() <{level = 10 : i32, message = "bnm,bmd->bnd"}> : () -> ()
    %cst_16 = arith.constant dense<0.000000e+00> : vector<2x8x16xf32>
    %48 = tpu.matmul %47, %35, %cst_16 {dimension_numbers = #tpu.dot_dimension_numbers<[2], [1], [1], [2], [0, 0, 0, 1, 1, 2], [0], [0]>} : vector<2x8x8xbf16>, vector<2x8x16xbf16>, vector<2x8x16xf32> -> vector<2x8x16xf32>
    "tpu.trace_stop"() : () -> ()
    %49 = arith.truncf %48 : vector<2x8x16xf32> to vector<2x8x16xbf16>
    %50 = vector.extract_strided_slice %29 {offsets = [0, 0, 16], sizes = [2, 8, 16], strides = [1, 1, 1]} : vector<2x8x192xf32> to vector<2x8x16xf32>
    %51 = arith.truncf %50 : vector<2x8x16xf32> to vector<2x8x16xbf16>
    %52 = vector.extract_strided_slice %29 {offsets = [0, 0, 80], sizes = [2, 8, 16], strides = [1, 1, 1]} : vector<2x8x192xf32> to vector<2x8x16xf32>
    %53 = arith.truncf %52 : vector<2x8x16xf32> to vector<2x8x16xbf16>
    %54 = vector.extract_strided_slice %29 {offsets = [0, 0, 144], sizes = [2, 8, 16], strides = [1, 1, 1]} : vector<2x8x192xf32> to vector<2x8x16xf32>
    %55 = arith.truncf %54 : vector<2x8x16xf32> to vector<2x8x16xbf16>
    "tpu.trace_start"() <{level = 10 : i32, message = "bnd,bmd->bnm"}> : () -> ()
    %cst_17 = arith.constant dense<0.000000e+00> : vector<2x8x8xf32>
    %56 = tpu.matmul %51, %53, %cst_17 {dimension_numbers = #tpu.dot_dimension_numbers<[2], [2], [1], [1], [0, 0, 0, 1, 1, 1], [0], [0]>} : vector<2x8x16xbf16>, vector<2x8x16xbf16>, vector<2x8x8xf32> -> vector<2x8x8xf32>
    "tpu.trace_stop"() : () -> ()
    %cst_18 = arith.constant dense<0xFF800000> : vector<2x8xf32>
    %57 = vector.multi_reduction <maximumf>, %56, %cst_18 [2] : vector<2x8x8xf32> to vector<2x8xf32>
    %58 = vector.shape_cast %57 : vector<2x8xf32> to vector<2x8x1xf32>
    %59 = vector.broadcast %58 : vector<2x8x1xf32> to vector<2x8x8xf32>
    %60 = arith.subf %56, %59 : vector<2x8x8xf32>
    %61 = math.exp %60 : vector<2x8x8xf32>
    %cst_19 = arith.constant dense<0.000000e+00> : vector<2x8xf32>
    %62 = vector.multi_reduction <add>, %61, %cst_19 [2] : vector<2x8x8xf32> to vector<2x8xf32>
    %63 = vector.shape_cast %62 : vector<2x8xf32> to vector<2x8x1xf32>
    %64 = tpu.reciprocal %63 {approx = true} : vector<2x8x1xf32> -> vector<2x8x1xf32>
    %65 = vector.broadcast %64 : vector<2x8x1xf32> to vector<2x8x8xf32>
    %66 = arith.mulf %61, %65 : vector<2x8x8xf32>
    %67 = arith.truncf %66 : vector<2x8x8xf32> to vector<2x8x8xbf16>
    "tpu.trace_start"() <{level = 10 : i32, message = "bnm,bmd->bnd"}> : () -> ()
    %cst_20 = arith.constant dense<0.000000e+00> : vector<2x8x16xf32>
    %68 = tpu.matmul %67, %55, %cst_20 {dimension_numbers = #tpu.dot_dimension_numbers<[2], [1], [1], [2], [0, 0, 0, 1, 1, 2], [0], [0]>} : vector<2x8x8xbf16>, vector<2x8x16xbf16>, vector<2x8x16xf32> -> vector<2x8x16xf32>
    "tpu.trace_stop"() : () -> ()
    %69 = arith.truncf %68 : vector<2x8x16xf32> to vector<2x8x16xbf16>
    %70 = vector.extract_strided_slice %29 {offsets = [0, 0, 32], sizes = [2, 8, 16], strides = [1, 1, 1]} : vector<2x8x192xf32> to vector<2x8x16xf32>
    %71 = arith.truncf %70 : vector<2x8x16xf32> to vector<2x8x16xbf16>
    %72 = vector.extract_strided_slice %29 {offsets = [0, 0, 96], sizes = [2, 8, 16], strides = [1, 1, 1]} : vector<2x8x192xf32> to vector<2x8x16xf32>
    %73 = arith.truncf %72 : vector<2x8x16xf32> to vector<2x8x16xbf16>
    %74 = vector.extract_strided_slice %29 {offsets = [0, 0, 160], sizes = [2, 8, 16], strides = [1, 1, 1]} : vector<2x8x192xf32> to vector<2x8x16xf32>
    %75 = arith.truncf %74 : vector<2x8x16xf32> to vector<2x8x16xbf16>
    "tpu.trace_start"() <{level = 10 : i32, message = "bnd,bmd->bnm"}> : () -> ()
    %cst_21 = arith.constant dense<0.000000e+00> : vector<2x8x8xf32>
    %76 = tpu.matmul %71, %73, %cst_21 {dimension_numbers = #tpu.dot_dimension_numbers<[2], [2], [1], [1], [0, 0, 0, 1, 1, 1], [0], [0]>} : vector<2x8x16xbf16>, vector<2x8x16xbf16>, vector<2x8x8xf32> -> vector<2x8x8xf32>
    "tpu.trace_stop"() : () -> ()
    %cst_22 = arith.constant dense<0xFF800000> : vector<2x8xf32>
    %77 = vector.multi_reduction <maximumf>, %76, %cst_22 [2] : vector<2x8x8xf32> to vector<2x8xf32>
    %78 = vector.shape_cast %77 : vector<2x8xf32> to vector<2x8x1xf32>
    %79 = vector.broadcast %78 : vector<2x8x1xf32> to vector<2x8x8xf32>
    %80 = arith.subf %76, %79 : vector<2x8x8xf32>
    %81 = math.exp %80 : vector<2x8x8xf32>
    %cst_23 = arith.constant dense<0.000000e+00> : vector<2x8xf32>
    %82 = vector.multi_reduction <add>, %81, %cst_23 [2] : vector<2x8x8xf32> to vector<2x8xf32>
    %83 = vector.shape_cast %82 : vector<2x8xf32> to vector<2x8x1xf32>
    %84 = tpu.reciprocal %83 {approx = true} : vector<2x8x1xf32> -> vector<2x8x1xf32>
    %85 = vector.broadcast %84 : vector<2x8x1xf32> to vector<2x8x8xf32>
    %86 = arith.mulf %81, %85 : vector<2x8x8xf32>
    %87 = arith.truncf %86 : vector<2x8x8xf32> to vector<2x8x8xbf16>
    "tpu.trace_start"() <{level = 10 : i32, message = "bnm,bmd->bnd"}> : () -> ()
    %cst_24 = arith.constant dense<0.000000e+00> : vector<2x8x16xf32>
    %88 = tpu.matmul %87, %75, %cst_24 {dimension_numbers = #tpu.dot_dimension_numbers<[2], [1], [1], [2], [0, 0, 0, 1, 1, 2], [0], [0]>} : vector<2x8x8xbf16>, vector<2x8x16xbf16>, vector<2x8x16xf32> -> vector<2x8x16xf32>
    "tpu.trace_stop"() : () -> ()
    %89 = arith.truncf %88 : vector<2x8x16xf32> to vector<2x8x16xbf16>
    %90 = vector.extract_strided_slice %29 {offsets = [0, 0, 48], sizes = [2, 8, 16], strides = [1, 1, 1]} : vector<2x8x192xf32> to vector<2x8x16xf32>
    %91 = arith.truncf %90 : vector<2x8x16xf32> to vector<2x8x16xbf16>
    %92 = vector.extract_strided_slice %29 {offsets = [0, 0, 112], sizes = [2, 8, 16], strides = [1, 1, 1]} : vector<2x8x192xf32> to vector<2x8x16xf32>
    %93 = arith.truncf %92 : vector<2x8x16xf32> to vector<2x8x16xbf16>
    %94 = vector.extract_strided_slice %29 {offsets = [0, 0, 176], sizes = [2, 8, 16], strides = [1, 1, 1]} : vector<2x8x192xf32> to vector<2x8x16xf32>
    %95 = arith.truncf %94 : vector<2x8x16xf32> to vector<2x8x16xbf16>
    "tpu.trace_start"() <{level = 10 : i32, message = "bnd,bmd->bnm"}> : () -> ()
    %cst_25 = arith.constant dense<0.000000e+00> : vector<2x8x8xf32>
    %96 = tpu.matmul %91, %93, %cst_25 {dimension_numbers = #tpu.dot_dimension_numbers<[2], [2], [1], [1], [0, 0, 0, 1, 1, 1], [0], [0]>} : vector<2x8x16xbf16>, vector<2x8x16xbf16>, vector<2x8x8xf32> -> vector<2x8x8xf32>
    "tpu.trace_stop"() : () -> ()
    %cst_26 = arith.constant dense<0xFF800000> : vector<2x8xf32>
    %97 = vector.multi_reduction <maximumf>, %96, %cst_26 [2] : vector<2x8x8xf32> to vector<2x8xf32>
    %98 = vector.shape_cast %97 : vector<2x8xf32> to vector<2x8x1xf32>
    %99 = vector.broadcast %98 : vector<2x8x1xf32> to vector<2x8x8xf32>
    %100 = arith.subf %96, %99 : vector<2x8x8xf32>
    %101 = math.exp %100 : vector<2x8x8xf32>
    %cst_27 = arith.constant dense<0.000000e+00> : vector<2x8xf32>
    %102 = vector.multi_reduction <add>, %101, %cst_27 [2] : vector<2x8x8xf32> to vector<2x8xf32>
    %103 = vector.shape_cast %102 : vector<2x8xf32> to vector<2x8x1xf32>
    %104 = tpu.reciprocal %103 {approx = true} : vector<2x8x1xf32> -> vector<2x8x1xf32>
    %105 = vector.broadcast %104 : vector<2x8x1xf32> to vector<2x8x8xf32>
    %106 = arith.mulf %101, %105 : vector<2x8x8xf32>
    %107 = arith.truncf %106 : vector<2x8x8xf32> to vector<2x8x8xbf16>
    "tpu.trace_start"() <{level = 10 : i32, message = "bnm,bmd->bnd"}> : () -> ()
    %cst_28 = arith.constant dense<0.000000e+00> : vector<2x8x16xf32>
    %108 = tpu.matmul %107, %95, %cst_28 {dimension_numbers = #tpu.dot_dimension_numbers<[2], [1], [1], [2], [0, 0, 0, 1, 1, 2], [0], [0]>} : vector<2x8x8xbf16>, vector<2x8x16xbf16>, vector<2x8x16xf32> -> vector<2x8x16xf32>
    "tpu.trace_stop"() : () -> ()
    %109 = arith.truncf %108 : vector<2x8x16xf32> to vector<2x8x16xbf16>
    %110 = tpu.concatenate %49, %69, %89, %109 in 2 : vector<2x8x16xbf16>, vector<2x8x16xbf16>, vector<2x8x16xbf16>, vector<2x8x16xbf16> -> vector<2x8x64xbf16>
    %111 = vector.shape_cast %110 : vector<2x8x64xbf16> to vector<16x64xbf16>
    %c0_29 = arith.constant 0 : index
    %c0_30 = arith.constant 0 : index
    %112 = vector.load %arg5[%c0_29, %c0_30] : memref<64x32xbf16, #tpu.memory_space<vmem>>, vector<64x32xbf16>
    %cst_31 = arith.constant dense<0.000000e+00> : vector<16x32xf32>
    %113 = tpu.matmul %111, %112, %cst_31 {dimension_numbers = #tpu.dot_dimension_numbers<[1], [0], [0], [1], [0, 0, 1, 1], [], []>} : vector<16x64xbf16>, vector<64x32xbf16>, vector<16x32xf32> -> vector<16x32xf32>
    %c0_32 = arith.constant 0 : index
    %c0_33 = arith.constant 0 : index
    %114 = vector.load %arg6[%c0_32, %c0_33] : memref<1x32xf32, #tpu.memory_space<vmem>>, vector<1x32xf32>
    %115 = vector.broadcast %114 : vector<1x32xf32> to vector<16x32xf32>
    %116 = arith.addf %113, %115 : vector<16x32xf32>
    %117 = vector.shape_cast %116 : vector<16x32xf32> to vector<2x8x32xf32>
    %c0_34 = arith.constant 0 : index
    %c0_35 = arith.constant 0 : index
    %c0_36 = arith.constant 0 : index
    %118 = vector.load %arg7[%c0_34, %c0_35, %c0_36] : memref<2x8x32xf32, #tpu.memory_space<vmem>>, vector<2x8x32xf32>
    tpu.vector_store %arg7[%c0_34, %c0_35, %c0_36], %117 {strides = array<i32>} : memref<2x8x32xf32, #tpu.memory_space<vmem>>, vector<2x8x32xf32>,
    return
  }
  func.func @transform_0(%arg0: i32) -> (i32, i32, i32) {
    %c0_i32 = arith.constant 0 : i32
    %c0_i32_0 = arith.constant 0 : i32
    %c0_i32_1 = arith.constant 0 : i32
    return %arg0, %c0_i32, %c0_i32_0 : i32, i32, i32
  }
  func.func @transform_1(%arg0: i32) -> (i32, i32) {
    %c0_i32 = arith.constant 0 : i32
    %c0_i32_0 = arith.constant 0 : i32
    %c0_i32_1 = arith.constant 0 : i32
    return %c0_i32, %c0_i32_0 : i32, i32
  }
  func.func @transform_2(%arg0: i32) -> (i32, i32) {
    %c0_i32 = arith.constant 0 : i32
    %c0_i32_0 = arith.constant 0 : i32
    %c0_i32_1 = arith.constant 0 : i32
    return %c0_i32, %c0_i32_0 : i32, i32
  }
  func.func @transform_3(%arg0: i32) -> (i32, i32) {
    %c0_i32 = arith.constant 0 : i32
    %c0_i32_0 = arith.constant 0 : i32
    %c0_i32_1 = arith.constant 0 : i32
    return %c0_i32, %c0_i32_0 : i32, i32
  }
  func.func @transform_4(%arg0: i32) -> (i32, i32) {
    %c0_i32 = arith.constant 0 : i32
    %c0_i32_0 = arith.constant 0 : i32
    %c0_i32_1 = arith.constant 0 : i32
    return %c0_i32, %c0_i32_0 : i32, i32
  }
  func.func @transform_5(%arg0: i32) -> (i32, i32) {
    %c0_i32 = arith.constant 0 : i32
    %c0_i32_0 = arith.constant 0 : i32
    %c0_i32_1 = arith.constant 0 : i32
    return %c0_i32, %c0_i32_0 : i32, i32
  }
  func.func @transform_6(%arg0: i32) -> (i32, i32, i32) {
    %c0_i32 = arith.constant 0 : i32
    %c0_i32_0 = arith.constant 0 : i32
    %c0_i32_1 = arith.constant 0 : i32
    return %arg0, %c0_i32, %c0_i32_0 : i32, i32, i32
  }
}

</mosaic_0001>

<llo_original>
// kernel: tpu_custom_call.1
$region0: #{tpu_custom_call.1}
  #allocation0 [shape = 'u32[]', space=smem, size = 0x4, offset = 0x4, fixed_abs, tag = 'smem constant byte address 0x4 - core index']
  #allocation1 [shape = 'u32[144,128]{1,0:T(1,128)}', space=vmem, size = 0x12000, scoped, tag = 'internal scratch']
  %s0 = inlined_call_operand.vmem [shape: f32[2,8,32], index: 0, kind: input, shape index: {}]
  %s1 = inlined_call_operand.vmem [shape: f32[1,32], index: 1, kind: input, shape index: {}]
  %s2 = inlined_call_operand.vmem [shape: f32[1,32], index: 2, kind: input, shape index: {}]
  %s3 = inlined_call_operand.vmem [shape: bf16[32,192], index: 3, kind: input, shape index: {}]
  %s4 = inlined_call_operand.vmem [shape: bf16[64,32], index: 4, kind: input, shape index: {}]
  %s5 = inlined_call_operand.vmem [shape: f32[1,32], index: 5, kind: input, shape index: {}]
  %s6 = inlined_call_operand.hbm [shape: f32[2,8,32], index: 6, kind: output, shape index: {}]
  %s7 = sld [smem:[#allocation0]]
  $region34: #{tpu_custom_call.1} parent=0
    _
  %s9 = ssub.s32 1, %s7
  %s10 = scalar_select 0, %s9, %s7
  $region1: #{tpu_custom_call.1} parent=0
    #allocation2 [shape = 'u8[8192]{0}', space=vmem, size = 0x2000, scoped, tag = 'output window, operand 0, single buffered']
    #allocation3 [shape = 's32[1]{0}', space=sflag, size = 0x4, scoped, tag = 'scoped memory for tpu_custom_call.1']
    %11 = vsyncpa [#allocation3], 0
    // Predicated region
    $region2: #{tpu_custom_call.1} parent=1 // pred_check
      _
    $region3: #{tpu_custom_call.1} parent=1 // pred_check_branch
      %13 = sbr.rel (0) target = $region5
    $region4: #{tpu_custom_call.1} parent=1 // pred_region
      _
    $region5: #{tpu_custom_call.1} parent=1 // pred_fallthru
      _
    // Predicated region
    $region6: #{tpu_custom_call.1} parent=1 // pred_check
      _
    $region7: #{tpu_custom_call.1} parent=1 // pred_check_branch
      %15 = sbr.rel (0) target = $region9
    $region8: #{tpu_custom_call.1} parent=1 // pred_region
      _
    $region9: #{tpu_custom_call.1} parent=1 // pred_fallthru
      _
    // Predicated region
    $region10: #{tpu_custom_call.1} parent=1 // pred_check
      _
    $region11: #{tpu_custom_call.1} parent=1 // pred_check_branch
      %17 = sbr.rel (0) target = $region13
    $region12: #{tpu_custom_call.1} parent=1 // pred_region
      _
    $region13: #{tpu_custom_call.1} parent=1 // pred_fallthru
      _
    // Predicated region
    $region14: #{tpu_custom_call.1} parent=1 // pred_check
      _
    $region15: #{tpu_custom_call.1} parent=1 // pred_check_branch
      %19 = sbr.rel (0) target = $region17
    $region16: #{tpu_custom_call.1} parent=1 // pred_region
      _
    $region17: #{tpu_custom_call.1} parent=1 // pred_fallthru
      _
    // Predicated region
    $region18: #{tpu_custom_call.1} parent=1 // pred_check
      _
    $region19: #{tpu_custom_call.1} parent=1 // pred_check_branch
      %21 = sbr.rel (0) target = $region21
    $region20: #{tpu_custom_call.1} parent=1 // pred_region
      _
    $region21: #{tpu_custom_call.1} parent=1 // pred_fallthru
      _
    // Predicated region
    $region22: #{tpu_custom_call.1} parent=1 // pred_check
      _
    $region23: #{tpu_custom_call.1} parent=1 // pred_check_branch
      %23 = sbr.rel (0) target = $region25
    $region24: #{tpu_custom_call.1} parent=1 // pred_region
      _
    $region25: #{tpu_custom_call.1} parent=1 // pred_fallthru
      _
    %v25 = vld [vmem:[%s0] sm:$0xff]
    %v26 = vld [vmem:[%s0 + $0x8] sm:$0xff]
    %vm27 = vcmask 261120
    %v28 = vsel %vm27, %v25, 0.0
    %29 = vadd.xlane.f32.xlu0 %v28
    %v30 = vpop.xlane.xlu0 %29
    %v31 = vsel %vm27, %v26, 0.0
    %32 = vadd.xlane.f32.xlu0 %v31
    %v33 = vpop.xlane.xlu0 %32
    %v34 = vrcp.pop 32.0
    %v35 = vmul.f32 %v30, %v34
    %v36 = vmul.f32 %v33, %v34
    %v37 = vsub.f32 %v25, %v35
    %v38 = vsub.f32 %v26, %v36
    %v39 = vmul.f32 %v37, %v37
    %v40 = vmul.f32 %v38, %v38
    %v41 = vsel %vm27, %v39, 0.0
    %42 = vadd.xlane.f32.xlu0 %v41
    %v43 = vpop.xlane.xlu0 %42
    %v44 = vsel %vm27, %v40, 0.0
    %45 = vadd.xlane.f32.xlu0 %v44
    %v46 = vpop.xlane.xlu0 %45
    %v47 = vmul.f32 %v43, %v34
    %v48 = vmul.f32 %v46, %v34
    %v49 = vadd.f32 %v47, 1e-05
    %v50 = vadd.f32 %v48, 1e-05
    %v51 = vrsqrt.pop %v49
    %v52 = vrsqrt.pop %v50
    %v53 = vmul.f32 %v37, %v51
    %v54 = vmul.f32 %v38, %v52
    %v55 = vld [vmem:[%s1] sm:$0x1]
    %v57 = vlaneseq
    %v58 = vshrl.u32 %v57, 7
    %v59 = vsub.s32 0, %v58
    %v60 = vrot.slane %v55, %v59
    %v62 = vmul.f32 %v53, %v60
    %v63 = vmul.f32 %v54, %v60
    %v64 = vld [vmem:[%s2] sm:$0x1]
    %v66 = vlaneseq
    %v67 = vshrl.u32 %v66, 7
    %v68 = vsub.s32 0, %v67
    %v69 = vrot.slane %v64, %v68
    %v71 = vadd.f32 %v62, %v69
    %v72 = vadd.f32 %v63, %v69
    %v73 = vpack.c.bf16 %v72, %v71
    %v74 = vld [vmem:[%s3] sm:$0xff]
    %v75 = vld [vmem:[%s3 + $0x8] sm:$0xff]
    %v76 = vld [vmem:[%s3 + $0x10] sm:$0xff]
    %v77 = vld [vmem:[%s3 + $0x18] sm:$0xff]
    %v82 = vunpack.c.l.b16 %v74
    %v83 = vunpack.c.h.b16 %v74
    %v84 = vunpack.c.l.b16 %v75
    %v85 = vunpack.c.h.b16 %v75
    %v86 = vunpack.c.l.b16 %v76
    %v87 = vunpack.c.h.b16 %v76
    %v88 = vunpack.c.l.b16 %v77
    %v89 = vunpack.c.h.b16 %v77
    %v90 = vpack.c.b16 %v84, %v82
    %v91 = vpack.c.b16 %v85, %v83
    %v92 = vpack.c.b16 %v88, %v86
    %v93 = vpack.c.b16 %v89, %v87
    %v99 = vsel %vm27, %v73, 0
    %101 = vmatprep.subr.bf16.mxu0 0
    %102 = vmatpush1.bf16.msra.mxu0 0
    %103 = vmatprep.subr.bf16.mxu0 0
    %104 = vmatpush1.bf16.msra.mxu0 0
    %105 = vmatprep.subr.bf16.mxu0 0
    %106 = vmatpush1.bf16.msra.mxu0 0
    %107 = vmatprep.subr.bf16.mxu0 0
    %108 = vmatpush1.bf16.msra.mxu0 0
    %109 = vmatprep.subr.bf16.mxu0 0
    %110 = vmatpush1.bf16.msra.mxu0 0
    %111 = vmatprep.subr.bf16.mxu0 0
    %112 = vmatpush1.bf16.msra.mxu0 0
    %113 = vmatprep.subr.bf16.mxu0 %v93
    %114 = vmatpush1.bf16.msra.mxu0 %v92
    %115 = vmatprep.subr.bf16.mxu0 %v91
    %116 = vmatpush1.bf16.msra.mxu0 %v90
    %117 = vmatprep.subr.bf16.mxu0 0
    %118 = vmatpush2.bf16.msra.mxu0 0
    %119 = vmatprep.subr.bf16.mxu0 0
    %120 = vmatpush2.bf16.msra.mxu0 0
    %121 = vmatprep.subr.bf16.mxu0 0
    %122 = vmatpush2.bf16.msra.mxu0 0
    %123 = vmatprep.subr.bf16.mxu0 0
    %124 = vmatpush2.bf16.msra.mxu0 0
    %125 = vmatprep.subr.bf16.mxu0 0
    %126 = vmatpush2.bf16.msra.mxu0 0
    %127 = vmatprep.subr.bf16.mxu0 0
    %128 = vmatpush2.bf16.msra.mxu0 0
    %129 = vmatprep.subr.bf16.mxu0 0
    %130 = vmatpush2.bf16.msra.mxu0 0
    %131 = vmatprep.subr.bf16.mxu0 0
    %132 = vmatpush2.bf16.msra.mxu0 0
    %133 = vmatprep.mubr.bf16.mxu0 0
    %134 = vmatmul.mubr.bf16.gmra.mxu0 %v99
    %v135 = vpop.f32.mrf.mxu0
    %v136 = vadd.f32 0.0, %v135
    %v137 = vpop.f32.mrf.mxu0
    %v138 = vadd.f32 0.0, %v137
    %v139 = vpop.f32.mrf.mxu0
    %v140 = vadd.f32 0.0, %v139
    %v141 = vpop.f32.mrf.mxu0
    %v142 = vadd.f32 0.0, %v141
    %143 = vdwg.mxu0
    %v144 = vpack.c.bf16 %v136, %v136
    %v145 = vpack.c.bf16 %v140, %v140
    %v146 = vpack.c.bf16 %v138, %v138
    %v147 = vpack.c.bf16 %v142, %v142
    %149 = vrot.lane.b32.xlu0 %v144, 64
    %v150 = vpop.permute.xlu0 %149
    %vm151 = vcmask 130048
    %v153 = vsel %vm151, %v144, 0
    %v156 = vsel %vm151, %v150, 0
    %158 = vmatprep.subr.bf16.mxu0 0
    %159 = vmatpush1.bf16.xpose.msra.mxu0 0
    %160 = vmatprep.subr.bf16.mxu0 0
    %161 = vmatpush1.bf16.xpose.msra.mxu0 0
    %162 = vmatprep.subr.bf16.mxu0 0
    %163 = vmatpush1.bf16.xpose.msra.mxu0 0
    %164 = vmatprep.subr.bf16.mxu0 0
    %165 = vmatpush1.bf16.xpose.msra.mxu0 0
    %166 = vmatprep.subr.bf16.mxu0 0
    %167 = vmatpush1.bf16.xpose.msra.mxu0 0
    %168 = vmatprep.subr.bf16.mxu0 0
    %169 = vmatpush1.bf16.xpose.msra.mxu0 0
    %170 = vmatprep.subr.bf16.mxu0 0
    %171 = vmatpush1.bf16.xpose.msra.mxu0 0
    %172 = vmatprep.subr.bf16.mxu0 0
    %173 = vmatpush1.bf16.xpose.msra.mxu0 %v156
    %174 = vmatprep.subr.bf16.mxu0 0
    %175 = vmatpush2.bf16.xpose.msra.mxu0 0
    %176 = vmatprep.subr.bf16.mxu0 0
    %177 = vmatpush2.bf16.xpose.msra.mxu0 0
    %178 = vmatprep.subr.bf16.mxu0 0
    %179 = vmatpush2.bf16.xpose.msra.mxu0 0
    %180 = vmatprep.subr.bf16.mxu0 0
    %181 = vmatpush2.bf16.xpose.msra.mxu0 0
    %182 = vmatprep.subr.bf16.mxu0 0
    %183 = vmatpush2.bf16.xpose.msra.mxu0 0
    %184 = vmatprep.subr.bf16.mxu0 0
    %185 = vmatpush2.bf16.xpose.msra.mxu0 0
    %186 = vmatprep.subr.bf16.mxu0 0
    %187 = vmatpush2.bf16.xpose.msra.mxu0 0
    %188 = vmatprep.subr.bf16.mxu0 0
    %189 = vmatpush2.bf16.xpose.msra.mxu0 0
    %190 = vmatprep.mubr.bf16.mxu0 0
    %191 = vmatmul.mubr.bf16.gmra.mxu0 %v153
    %v192 = vpop.f32.mrf.mxu0
    %v193 = vadd.f32 0.0, %v192
    %v194 = vpop.f32.mrf.mxu0
    %v195 = vpop.f32.mrf.mxu0
    %v196 = vpop.f32.mrf.mxu0
    %197 = vdwg.mxu0
    %199 = vrot.lane.b32.xlu0 %v145, 64
    %v200 = vpop.permute.xlu0 %199
    %v202 = vsel %vm151, %v145, 0
    %v205 = vsel %vm151, %v200, 0
    %207 = vmatprep.subr.bf16.mxu0 0
    %208 = vmatpush1.bf16.xpose.msra.mxu0 0
    %209 = vmatprep.subr.bf16.mxu0 0
    %210 = vmatpush1.bf16.xpose.msra.mxu0 0
    %211 = vmatprep.subr.bf16.mxu0 0
    %212 = vmatpush1.bf16.xpose.msra.mxu0 0
    %213 = vmatprep.subr.bf16.mxu0 0
    %214 = vmatpush1.bf16.xpose.msra.mxu0 0
    %215 = vmatprep.subr.bf16.mxu0 0
    %216 = vmatpush1.bf16.xpose.msra.mxu0 0
    %217 = vmatprep.subr.bf16.mxu0 0
    %218 = vmatpush1.bf16.xpose.msra.mxu0 0
    %219 = vmatprep.subr.bf16.mxu0 0
    %220 = vmatpush1.bf16.xpose.msra.mxu0 0
    %221 = vmatprep.subr.bf16.mxu0 0
    %222 = vmatpush1.bf16.xpose.msra.mxu0 %v205
    %223 = vmatprep.subr.bf16.mxu0 0
    %224 = vmatpush2.bf16.xpose.msra.mxu0 0
    %225 = vmatprep.subr.bf16.mxu0 0
    %226 = vmatpush2.bf16.xpose.msra.mxu0 0
    %227 = vmatprep.subr.bf16.mxu0 0
    %228 = vmatpush2.bf16.xpose.msra.mxu0 0
    %229 = vmatprep.subr.bf16.mxu0 0
    %230 = vmatpush2.bf16.xpose.msra.mxu0 0
    %231 = vmatprep.subr.bf16.mxu0 0
    %232 = vmatpush2.bf16.xpose.msra.mxu0 0
    %233 = vmatprep.subr.bf16.mxu0 0
    %234 = vmatpush2.bf16.xpose.msra.mxu0 0
    %235 = vmatprep.subr.bf16.mxu0 0
    %236 = vmatpush2.bf16.xpose.msra.mxu0 0
    %237 = vmatprep.subr.bf16.mxu0 0
    %238 = vmatpush2.bf16.xpose.msra.mxu0 0
    %239 = vmatprep.mubr.bf16.mxu0 0
    %240 = vmatmul.mubr.bf16.gmra.mxu0 %v202
    %v241 = vpop.f32.mrf.mxu0
    %v242 = vadd.f32 0.0, %v241
    %v243 = vpop.f32.mrf.mxu0
    %v244 = vpop.f32.mrf.mxu0
    %v245 = vpop.f32.mrf.mxu0
    %246 = vdwg.mxu0
    %vm247 = vcmask 64512
    %v248 = vsel %vm247, %v193, -inf
    %249 = vmax.xlane.f32.xlu0 %v248
    %v250 = vpop.xlane.xlu0 %249
    %v251 = vsel %vm247, %v242, -inf
    %252 = vmax.xlane.f32.xlu0 %v251
    %v253 = vpop.xlane.xlu0 %252
    %v254 = vsub.f32 %v193, %v250
    %v255 = vsub.f32 %v242, %v253
    %v256 = vmul.f32 %v254, 1.442695
    %v257 = vpow.pop %v256
    %v258 = vmul.f32 %v255, 1.442695
    %v259 = vpow.pop %v258
    %v260 = vsel %vm247, %v257, 0.0
    %261 = vadd.xlane.f32.xlu0 %v260
    %v262 = vpop.xlane.xlu0 %261
    %v263 = vsel %vm247, %v259, 0.0
    %264 = vadd.xlane.f32.xlu0 %v263
    %v265 = vpop.xlane.xlu0 %264
    %v266 = vrcp.pop %v262
    %v267 = vrcp.pop %v265
    %v268 = vmul.f32 %v257, %v266
    %v269 = vmul.f32 %v259, %v267
    %v270 = vpack.c.bf16 %v268, %v268
    %v271 = vpack.c.bf16 %v269, %v269
    %v273 = vsel %vm247, %v270, 0
    %vm275 = vcmask 1043456
    %v277 = vsel %vm275, %v146, 0
    %279 = vmatprep.subr.bf16.mxu0 0
    %280 = vmatpush1.bf16.msra.mxu0 0
    %281 = vmatprep.subr.bf16.mxu0 0
    %282 = vmatpush1.bf16.msra.mxu0 0
    %283 = vmatprep.subr.bf16.mxu0 0
    %284 = vmatpush1.bf16.msra.mxu0 0
    %285 = vmatprep.subr.bf16.mxu0 0
    %286 = vmatpush1.bf16.msra.mxu0 0
    %287 = vmatprep.subr.bf16.mxu0 0
    %288 = vmatpush1.bf16.msra.mxu0 0
    %289 = vmatprep.subr.bf16.mxu0 0
    %290 = vmatpush1.bf16.msra.mxu0 0
    %291 = vmatprep.subr.bf16.mxu0 0
    %292 = vmatpush1.bf16.msra.mxu0 0
    %293 = vmatprep.subr.bf16.mxu0 0
    %294 = vmatpush1.bf16.msra.mxu0 %v277
    %295 = vmatprep.subr.bf16.mxu0 0
    %296 = vmatpush2.bf16.msra.mxu0 0
    %297 = vmatprep.subr.bf16.mxu0 0
    %298 = vmatpush2.bf16.msra.mxu0 0
    %299 = vmatprep.subr.bf16.mxu0 0
    %300 = vmatpush2.bf16.msra.mxu0 0
    %301 = vmatprep.subr.bf16.mxu0 0
    %302 = vmatpush2.bf16.msra.mxu0 0
    %303 = vmatprep.subr.bf16.mxu0 0
    %304 = vmatpush2.bf16.msra.mxu0 0
    %305 = vmatprep.subr.bf16.mxu0 0
    %306 = vmatpush2.bf16.msra.mxu0 0
    %307 = vmatprep.subr.bf16.mxu0 0
    %308 = vmatpush2.bf16.msra.mxu0 0
    %309 = vmatprep.subr.bf16.mxu0 0
    %310 = vmatpush2.bf16.msra.mxu0 0
    %311 = vmatprep.mubr.bf16.mxu0 0
    %312 = vmatmul.mubr.bf16.gmra.mxu0 %v273
    %v313 = vpop.f32.mrf.mxu0
    %v314 = vadd.f32 0.0, %v313
    %v315 = vpop.f32.mrf.mxu0
    %v316 = vpop.f32.mrf.mxu0
    %v317 = vpop.f32.mrf.mxu0
    %318 = vdwg.mxu0
    %v320 = vsel %vm247, %v271, 0
    %v323 = vsel %vm275, %v147, 0
    %325 = vmatprep.subr.bf16.mxu0 0
    %326 = vmatpush1.bf16.msra.mxu0 0
    %327 = vmatprep.subr.bf16.mxu0 0
    %328 = vmatpush1.bf16.msra.mxu0 0
    %329 = vmatprep.subr.bf16.mxu0 0
    %330 = vmatpush1.bf16.msra.mxu0 0
    %331 = vmatprep.subr.bf16.mxu0 0
    %332 = vmatpush1.bf16.msra.mxu0 0
    %333 = vmatprep.subr.bf16.mxu0 0
    %334 = vmatpush1.bf16.msra.mxu0 0
    %335 = vmatprep.subr.bf16.mxu0 0
    %336 = vmatpush1.bf16.msra.mxu0 0
    %337 = vmatprep.subr.bf16.mxu0 0
    %338 = vmatpush1.bf16.msra.mxu0 0
    %339 = vmatprep.subr.bf16.mxu0 0
    %340 = vmatpush1.bf16.msra.mxu0 %v323
    %341 = vmatprep.subr.bf16.mxu0 0
    %342 = vmatpush2.bf16.msra.mxu0 0
    %343 = vmatprep.subr.bf16.mxu0 0
    %344 = vmatpush2.bf16.msra.mxu0 0
    %345 = vmatprep.subr.bf16.mxu0 0
    %346 = vmatpush2.bf16.msra.mxu0 0
    %347 = vmatprep.subr.bf16.mxu0 0
    %348 = vmatpush2.bf16.msra.mxu0 0
    %349 = vmatprep.subr.bf16.mxu0 0
    %350 = vmatpush2.bf16.msra.mxu0 0
    %351 = vmatprep.subr.bf16.mxu0 0
    %352 = vmatpush2.bf16.msra.mxu0 0
    %353 = vmatprep.subr.bf16.mxu0 0
    %354 = vmatpush2.bf16.msra.mxu0 0
    %355 = vmatprep.subr.bf16.mxu0 0
    %356 = vmatpush2.bf16.msra.mxu0 0
    %357 = vmatprep.mubr.bf16.mxu0 0
    %358 = vmatmul.mubr.bf16.gmra.mxu0 %v320
    %v359 = vpop.f32.mrf.mxu0
    %v360 = vadd.f32 0.0, %v359
    %v361 = vpop.f32.mrf.mxu0
    %v362 = vpop.f32.mrf.mxu0
    %v363 = vpop.f32.mrf.mxu0
    %364 = vdwg.mxu0
    %v365 = vpack.c.bf16 %v314, %v314
    %v366 = vpack.c.bf16 %v360, %v360
    %367 = vrot.lane.b32.xlu0 %v144, 112
    %v368 = vpop.permute.xlu0 %367
    %369 = vrot.lane.b32.xlu0 %v144, 48
    %v370 = vpop.permute.xlu0 %369
    %v372 = vsel %vm151, %v368, 0
    %v375 = vsel %vm151, %v370, 0
    %377 = vmatprep.subr.bf16.mxu0 0
    %378 = vmatpush1.bf16.xpose.msra.mxu0 0
    %379 = vmatprep.subr.bf16.mxu0 0
    %380 = vmatpush1.bf16.xpose.msra.mxu0 0
    %381 = vmatprep.subr.bf16.mxu0 0
    %382 = vmatpush1.bf16.xpose.msra.mxu0 0
    %383 = vmatprep.subr.bf16.mxu0 0
    %384 = vmatpush1.bf16.xpose.msra.mxu0 0
    %385 = vmatprep.subr.bf16.mxu0 0
    %386 = vmatpush1.bf16.xpose.msra.mxu0 0
    %387 = vmatprep.subr.bf16.mxu0 0
    %388 = vmatpush1.bf16.xpose.msra.mxu0 0
    %389 = vmatprep.subr.bf16.mxu0 0
    %390 = vmatpush1.bf16.xpose.msra.mxu0 0
    %391 = vmatprep.subr.bf16.mxu0 0
    %392 = vmatpush1.bf16.xpose.msra.mxu0 %v375
    %393 = vmatprep.subr.bf16.mxu0 0
    %394 = vmatpush2.bf16.xpose.msra.mxu0 0
    %395 = vmatprep.subr.bf16.mxu0 0
    %396 = vmatpush2.bf16.xpose.msra.mxu0 0
    %397 = vmatprep.subr.bf16.mxu0 0
    %398 = vmatpush2.bf16.xpose.msra.mxu0 0
    %399 = vmatprep.subr.bf16.mxu0 0
    %400 = vmatpush2.bf16.xpose.msra.mxu0 0
    %401 = vmatprep.subr.bf16.mxu0 0
    %402 = vmatpush2.bf16.xpose.msra.mxu0 0
    %403 = vmatprep.subr.bf16.mxu0 0
    %404 = vmatpush2.bf16.xpose.msra.mxu0 0
    %405 = vmatprep.subr.bf16.mxu0 0
    %406 = vmatpush2.bf16.xpose.msra.mxu0 0
    %407 = vmatprep.subr.bf16.mxu0 0
    %408 = vmatpush2.bf16.xpose.msra.mxu0 0
    %409 = vmatprep.mubr.bf16.mxu0 0
    %410 = vmatmul.mubr.bf16.gmra.mxu0 %v372
    %v411 = vpop.f32.mrf.mxu0
    %v412 = vadd.f32 0.0, %v411
    %v413 = vpop.f32.mrf.mxu0
    %v414 = vpop.f32.mrf.mxu0
    %v415 = vpop.f32.mrf.mxu0
    %416 = vdwg.mxu0
    %417 = vrot.lane.b32.xlu0 %v145, 112
    %v418 = vpop.permute.xlu0 %417
    %419 = vrot.lane.b32.xlu0 %v145, 48
    %v420 = vpop.permute.xlu0 %419
    %v422 = vsel %vm151, %v418, 0
    %v425 = vsel %vm151, %v420, 0
    %427 = vmatprep.subr.bf16.mxu0 0
    %428 = vmatpush1.bf16.xpose.msra.mxu0 0
    %429 = vmatprep.subr.bf16.mxu0 0
    %430 = vmatpush1.bf16.xpose.msra.mxu0 0
    %431 = vmatprep.subr.bf16.mxu0 0
    %432 = vmatpush1.bf16.xpose.msra.mxu0 0
    %433 = vmatprep.subr.bf16.mxu0 0
    %434 = vmatpush1.bf16.xpose.msra.mxu0 0
    %435 = vmatprep.subr.bf16.mxu0 0
    %436 = vmatpush1.bf16.xpose.msra.mxu0 0
    %437 = vmatprep.subr.bf16.mxu0 0
    %438 = vmatpush1.bf16.xpose.msra.mxu0 0
    %439 = vmatprep.subr.bf16.mxu0 0
    %440 = vmatpush1.bf16.xpose.msra.mxu0 0
    %441 = vmatprep.subr.bf16.mxu0 0
    %442 = vmatpush1.bf16.xpose.msra.mxu0 %v425
    %443 = vmatprep.subr.bf16.mxu0 0
    %444 = vmatpush2.bf16.xpose.msra.mxu0 0
    %445 = vmatprep.subr.bf16.mxu0 0
    %446 = vmatpush2.bf16.xpose.msra.mxu0 0
    %447 = vmatprep.subr.bf16.mxu0 0
    %448 = vmatpush2.bf16.xpose.msra.mxu0 0
    %449 = vmatprep.subr.bf16.mxu0 0
    %450 = vmatpush2.bf16.xpose.msra.mxu0 0
    %451 = vmatprep.subr.bf16.mxu0 0
    %452 = vmatpush2.bf16.xpose.msra.mxu0 0
    %453 = vmatprep.subr.bf16.mxu0 0
    %454 = vmatpush2.bf16.xpose.msra.mxu0 0
    %455 = vmatprep.subr.bf16.mxu0 0
    %456 = vmatpush2.bf16.xpose.msra.mxu0 0
    %457 = vmatprep.subr.bf16.mxu0 0
    %458 = vmatpush2.bf16.xpose.msra.mxu0 0
    %459 = vmatprep.mubr.bf16.mxu0 0
    %460 = vmatmul.mubr.bf16.gmra.mxu0 %v422
    %v461 = vpop.f32.mrf.mxu0
    %v462 = vadd.f32 0.0, %v461
    %v463 = vpop.f32.mrf.mxu0
    %v464 = vpop.f32.mrf.mxu0
    %v465 = vpop.f32.mrf.mxu0
    %466 = vdwg.mxu0
    %v467 = vsel %vm247, %v412, -inf
    %468 = vmax.xlane.f32.xlu0 %v467
    %v469 = vpop.xlane.xlu0 %468
    %v470 = vsel %vm247, %v462, -inf
    %471 = vmax.xlane.f32.xlu0 %v470
    %v472 = vpop.xlane.xlu0 %471
    %v473 = vsub.f32 %v412, %v469
    %v474 = vsub.f32 %v462, %v472
    %v475 = vmul.f32 %v473, 1.442695
    %v476 = vpow.pop %v475
    %v477 = vmul.f32 %v474, 1.442695
    %v478 = vpow.pop %v477
    %v479 = vsel %vm247, %v476, 0.0
    %480 = vadd.xlane.f32.xlu0 %v479
    %v481 = vpop.xlane.xlu0 %480
    %v482 = vsel %vm247, %v478, 0.0
    %483 = vadd.xlane.f32.xlu0 %v482
    %v484 = vpop.xlane.xlu0 %483
    %v485 = vrcp.pop %v481
    %v486 = vrcp.pop %v484
    %v487 = vmul.f32 %v476, %v485
    %v488 = vmul.f32 %v478, %v486
    %v489 = vpack.c.bf16 %v487, %v487
    %v490 = vpack.c.bf16 %v488, %v488
    %492 = vrot.lane.b32.xlu0 %v146, 112
    %v493 = vpop.permute.xlu0 %492
    %v495 = vsel %vm247, %v489, 0
    %v498 = vsel %vm275, %v493, 0
    %500 = vmatprep.subr.bf16.mxu0 0
    %501 = vmatpush1.bf16.msra.mxu0 0
    %502 = vmatprep.subr.bf16.mxu0 0
    %503 = vmatpush1.bf16.msra.mxu0 0
    %504 = vmatprep.subr.bf16.mxu0 0
    %505 = vmatpush1.bf16.msra.mxu0 0
    %506 = vmatprep.subr.bf16.mxu0 0
    %507 = vmatpush1.bf16.msra.mxu0 0
    %508 = vmatprep.subr.bf16.mxu0 0
    %509 = vmatpush1.bf16.msra.mxu0 0
    %510 = vmatprep.subr.bf16.mxu0 0
    %511 = vmatpush1.bf16.msra.mxu0 0
    %512 = vmatprep.subr.bf16.mxu0 0
    %513 = vmatpush1.bf16.msra.mxu0 0
    %514 = vmatprep.subr.bf16.mxu0 0
    %515 = vmatpush1.bf16.msra.mxu0 %v498
    %516 = vmatprep.subr.bf16.mxu0 0
    %517 = vmatpush2.bf16.msra.mxu0 0
    %518 = vmatprep.subr.bf16.mxu0 0
    %519 = vmatpush2.bf16.msra.mxu0 0
    %520 = vmatprep.subr.bf16.mxu0 0
    %521 = vmatpush2.bf16.msra.mxu0 0
    %522 = vmatprep.subr.bf16.mxu0 0
    %523 = vmatpush2.bf16.msra.mxu0 0
    %524 = vmatprep.subr.bf16.mxu0 0
    %525 = vmatpush2.bf16.msra.mxu0 0
    %526 = vmatprep.subr.bf16.mxu0 0
    %527 = vmatpush2.bf16.msra.mxu0 0
    %528 = vmatprep.subr.bf16.mxu0 0
    %529 = vmatpush2.bf16.msra.mxu0 0
    %530 = vmatprep.subr.bf16.mxu0 0
    %531 = vmatpush2.bf16.msra.mxu0 0
    %532 = vmatprep.mubr.bf16.mxu0 0
    %533 = vmatmul.mubr.bf16.gmra.mxu0 %v495
    %v534 = vpop.f32.mrf.mxu0
    %v535 = vadd.f32 0.0, %v534
    %v536 = vpop.f32.mrf.mxu0
    %v537 = vpop.f32.mrf.mxu0
    %v538 = vpop.f32.mrf.mxu0
    %539 = vdwg.mxu0
    %541 = vrot.lane.b32.xlu0 %v147, 112
    %v542 = vpop.permute.xlu0 %541
    %v544 = vsel %vm247, %v490, 0
    %v547 = vsel %vm275, %v542, 0
    %549 = vmatprep.subr.bf16.mxu0 0
    %550 = vmatpush1.bf16.msra.mxu0 0
    %551 = vmatprep.subr.bf16.mxu0 0
    %552 = vmatpush1.bf16.msra.mxu0 0
    %553 = vmatprep.subr.bf16.mxu0 0
    %554 = vmatpush1.bf16.msra.mxu0 0
    %555 = vmatprep.subr.bf16.mxu0 0
    %556 = vmatpush1.bf16.msra.mxu0 0
    %557 = vmatprep.subr.bf16.mxu0 0
    %558 = vmatpush1.bf16.msra.mxu0 0
    %559 = vmatprep.subr.bf16.mxu0 0
    %560 = vmatpush1.bf16.msra.mxu0 0
    %561 = vmatprep.subr.bf16.mxu0 0
    %562 = vmatpush1.bf16.msra.mxu0 0
    %563 = vmatprep.subr.bf16.mxu0 0
    %564 = vmatpush1.bf16.msra.mxu0 %v547
    %565 = vmatprep.subr.bf16.mxu0 0
    %566 = vmatpush2.bf16.msra.mxu0 0
    %567 = vmatprep.subr.bf16.mxu0 0
    %568 = vmatpush2.bf16.msra.mxu0 0
    %569 = vmatprep.subr.bf16.mxu0 0
    %570 = vmatpush2.bf16.msra.mxu0 0
    %571 = vmatprep.subr.bf16.mxu0 0
    %572 = vmatpush2.bf16.msra.mxu0 0
    %573 = vmatprep.subr.bf16.mxu0 0
    %574 = vmatpush2.bf16.msra.mxu0 0
    %575 = vmatprep.subr.bf16.mxu0 0
    %576 = vmatpush2.bf16.msra.mxu0 0
    %577 = vmatprep.subr.bf16.mxu0 0
    %578 = vmatpush2.bf16.msra.mxu0 0
    %579 = vmatprep.subr.bf16.mxu0 0
    %580 = vmatpush2.bf16.msra.mxu0 0
    %581 = vmatprep.mubr.bf16.mxu0 0
    %582 = vmatmul.mubr.bf16.gmra.mxu0 %v544
    %v583 = vpop.f32.mrf.mxu0
    %v584 = vadd.f32 0.0, %v583
    %v585 = vpop.f32.mrf.mxu0
    %v586 = vpop.f32.mrf.mxu0
    %v587 = vpop.f32.mrf.mxu0
    %588 = vdwg.mxu0
    %v589 = vpack.c.bf16 %v535, %v535
    %v590 = vpack.c.bf16 %v584, %v584
    %591 = vrot.lane.b32.xlu0 %v144, 96
    %v592 = vpop.permute.xlu0 %591
    %593 = vrot.lane.b32.xlu0 %v144, 32
    %v594 = vpop.permute.xlu0 %593
    %v596 = vsel %vm151, %v592, 0
    %v599 = vsel %vm151, %v594, 0
    %601 = vmatprep.subr.bf16.mxu0 0
    %602 = vmatpush1.bf16.xpose.msra.mxu0 0
    %603 = vmatprep.subr.bf16.mxu0 0
    %604 = vmatpush1.bf16.xpose.msra.mxu0 0
    %605 = vmatprep.subr.bf16.mxu0 0
    %606 = vmatpush1.bf16.xpose.msra.mxu0 0
    %607 = vmatprep.subr.bf16.mxu0 0
    %608 = vmatpush1.bf16.xpose.msra.mxu0 0
    %609 = vmatprep.subr.bf16.mxu0 0
    %610 = vmatpush1.bf16.xpose.msra.mxu0 0
    %611 = vmatprep.subr.bf16.mxu0 0
    %612 = vmatpush1.bf16.xpose.msra.mxu0 0
    %613 = vmatprep.subr.bf16.mxu0 0
    %614 = vmatpush1.bf16.xpose.msra.mxu0 0
    %615 = vmatprep.subr.bf16.mxu0 0
    %616 = vmatpush1.bf16.xpose.msra.mxu0 %v599
    %617 = vmatprep.subr.bf16.mxu0 0
    %618 = vmatpush2.bf16.xpose.msra.mxu0 0
    %619 = vmatprep.subr.bf16.mxu0 0
    %620 = vmatpush2.bf16.xpose.msra.mxu0 0
    %621 = vmatprep.subr.bf16.mxu0 0
    %622 = vmatpush2.bf16.xpose.msra.mxu0 0
    %623 = vmatprep.subr.bf16.mxu0 0
    %624 = vmatpush2.bf16.xpose.msra.mxu0 0
    %625 = vmatprep.subr.bf16.mxu0 0
    %626 = vmatpush2.bf16.xpose.msra.mxu0 0
    %627 = vmatprep.subr.bf16.mxu0 0
    %628 = vmatpush2.bf16.xpose.msra.mxu0 0
    %629 = vmatprep.subr.bf16.mxu0 0
    %630 = vmatpush2.bf16.xpose.msra.mxu0 0
    %631 = vmatprep.subr.bf16.mxu0 0
    %632 = vmatpush2.bf16.xpose.msra.mxu0 0
    %633 = vmatprep.mubr.bf16.mxu0 0
    %634 = vmatmul.mubr.bf16.gmra.mxu0 %v596
    %v635 = vpop.f32.mrf.mxu0
    %v636 = vadd.f32 0.0, %v635
    %v637 = vpop.f32.mrf.mxu0
    %v638 = vpop.f32.mrf.mxu0
    %v639 = vpop.f32.mrf.mxu0
    %640 = vdwg.mxu0
    %641 = vrot.lane.b32.xlu0 %v145, 96
    %v642 = vpop.permute.xlu0 %641
    %643 = vrot.lane.b32.xlu0 %v145, 32
    %v644 = vpop.permute.xlu0 %643
    %v646 = vsel %vm151, %v642, 0
    %v649 = vsel %vm151, %v644, 0
    %651 = vmatprep.subr.bf16.mxu0 0
    %652 = vmatpush1.bf16.xpose.msra.mxu0 0
    %653 = vmatprep.subr.bf16.mxu0 0
    %654 = vmatpush1.bf16.xpose.msra.mxu0 0
    %655 = vmatprep.subr.bf16.mxu0 0
    %656 = vmatpush1.bf16.xpose.msra.mxu0 0
    %657 = vmatprep.subr.bf16.mxu0 0
    %658 = vmatpush1.bf16.xpose.msra.mxu0 0
    %659 = vmatprep.subr.bf16.mxu0 0
    %660 = vmatpush1.bf16.xpose.msra.mxu0 0
    %661 = vmatprep.subr.bf16.mxu0 0
    %662 = vmatpush1.bf16.xpose.msra.mxu0 0
    %663 = vmatprep.subr.bf16.mxu0 0
    %664 = vmatpush1.bf16.xpose.msra.mxu0 0
    %665 = vmatprep.subr.bf16.mxu0 0
    %666 = vmatpush1.bf16.xpose.msra.mxu0 %v649
    %667 = vmatprep.subr.bf16.mxu0 0
    %668 = vmatpush2.bf16.xpose.msra.mxu0 0
    %669 = vmatprep.subr.bf16.mxu0 0
    %670 = vmatpush2.bf16.xpose.msra.mxu0 0
    %671 = vmatprep.subr.bf16.mxu0 0
    %672 = vmatpush2.bf16.xpose.msra.mxu0 0
    %673 = vmatprep.subr.bf16.mxu0 0
    %674 = vmatpush2.bf16.xpose.msra.mxu0 0
    %675 = vmatprep.subr.bf16.mxu0 0
    %676 = vmatpush2.bf16.xpose.msra.mxu0 0
    %677 = vmatprep.subr.bf16.mxu0 0
    %678 = vmatpush2.bf16.xpose.msra.mxu0 0
    %679 = vmatprep.subr.bf16.mxu0 0
    %680 = vmatpush2.bf16.xpose.msra.mxu0 0
    %681 = vmatprep.subr.bf16.mxu0 0
    %682 = vmatpush2.bf16.xpose.msra.mxu0 0
    %683 = vmatprep.mubr.bf16.mxu0 0
    %684 = vmatmul.mubr.bf16.gmra.mxu0 %v646
    %v685 = vpop.f32.mrf.mxu0
    %v686 = vadd.f32 0.0, %v685
    %v687 = vpop.f32.mrf.mxu0
    %v688 = vpop.f32.mrf.mxu0
    %v689 = vpop.f32.mrf.mxu0
    %690 = vdwg.mxu0
    %v691 = vsel %vm247, %v636, -inf
    %692 = vmax.xlane.f32.xlu0 %v691
    %v693 = vpop.xlane.xlu0 %692
    %v694 = vsel %vm247, %v686, -inf
    %695 = vmax.xlane.f32.xlu0 %v694
    %v696 = vpop.xlane.xlu0 %695
    %v697 = vsub.f32 %v636, %v693
    %v698 = vsub.f32 %v686, %v696
    %v699 = vmul.f32 %v697, 1.442695
    %v700 = vpow.pop %v699
    %v701 = vmul.f32 %v698, 1.442695
    %v702 = vpow.pop %v701
    %v703 = vsel %vm247, %v700, 0.0
    %704 = vadd.xlane.f32.xlu0 %v703
    %v705 = vpop.xlane.xlu0 %704
    %v706 = vsel %vm247, %v702, 0.0
    %707 = vadd.xlane.f32.xlu0 %v706
    %v708 = vpop.xlane.xlu0 %707
    %v709 = vrcp.pop %v705
    %v710 = vrcp.pop %v708
    %v711 = vmul.f32 %v700, %v709
    %v712 = vmul.f32 %v702, %v710
    %v713 = vpack.c.bf16 %v711, %v711
    %v714 = vpack.c.bf16 %v712, %v712
    %715 = vrot.lane.b32.xlu0 %v146, 96
    %v716 = vpop.permute.xlu0 %715
    %v718 = vsel %vm247, %v713, 0
    %v721 = vsel %vm275, %v716, 0
    %723 = vmatprep.subr.bf16.mxu0 0
    %724 = vmatpush1.bf16.msra.mxu0 0
    %725 = vmatprep.subr.bf16.mxu0 0
    %726 = vmatpush1.bf16.msra.mxu0 0
    %727 = vmatprep.subr.bf16.mxu0 0
    %728 = vmatpush1.bf16.msra.mxu0 0
    %729 = vmatprep.subr.bf16.mxu0 0
    %730 = vmatpush1.bf16.msra.mxu0 0
    %731 = vmatprep.subr.bf16.mxu0 0
    %732 = vmatpush1.bf16.msra.mxu0 0
    %733 = vmatprep.subr.bf16.mxu0 0
    %734 = vmatpush1.bf16.msra.mxu0 0
    %735 = vmatprep.subr.bf16.mxu0 0
    %736 = vmatpush1.bf16.msra.mxu0 0
    %737 = vmatprep.subr.bf16.mxu0 0
    %738 = vmatpush1.bf16.msra.mxu0 %v721
    %739 = vmatprep.subr.bf16.mxu0 0
    %740 = vmatpush2.bf16.msra.mxu0 0
    %741 = vmatprep.subr.bf16.mxu0 0
    %742 = vmatpush2.bf16.msra.mxu0 0
    %743 = vmatprep.subr.bf16.mxu0 0
    %744 = vmatpush2.bf16.msra.mxu0 0
    %745 = vmatprep.subr.bf16.mxu0 0
    %746 = vmatpush2.bf16.msra.mxu0 0
    %747 = vmatprep.subr.bf16.mxu0 0
    %748 = vmatpush2.bf16.msra.mxu0 0
    %749 = vmatprep.subr.bf16.mxu0 0
    %750 = vmatpush2.bf16.msra.mxu0 0
    %751 = vmatprep.subr.bf16.mxu0 0
    %752 = vmatpush2.bf16.msra.mxu0 0
    %753 = vmatprep.subr.bf16.mxu0 0
    %754 = vmatpush2.bf16.msra.mxu0 0
    %755 = vmatprep.mubr.bf16.mxu0 0
    %756 = vmatmul.mubr.bf16.gmra.mxu0 %v718
    %v757 = vpop.f32.mrf.mxu0
    %v758 = vadd.f32 0.0, %v757
    %v759 = vpop.f32.mrf.mxu0
    %v760 = vpop.f32.mrf.mxu0
    %v761 = vpop.f32.mrf.mxu0
    %762 = vdwg.mxu0
    %763 = vrot.lane.b32.xlu0 %v147, 96
    %v764 = vpop.permute.xlu0 %763
    %v766 = vsel %vm247, %v714, 0
    %v769 = vsel %vm275, %v764, 0
    %771 = vmatprep.subr.bf16.mxu0 0
    %772 = vmatpush1.bf16.msra.mxu0 0
    %773 = vmatprep.subr.bf16.mxu0 0
    %774 = vmatpush1.bf16.msra.mxu0 0
    %775 = vmatprep.subr.bf16.mxu0 0
    %776 = vmatpush1.bf16.msra.mxu0 0
    %777 = vmatprep.subr.bf16.mxu0 0
    %778 = vmatpush1.bf16.msra.mxu0 0
    %779 = vmatprep.subr.bf16.mxu0 0
    %780 = vmatpush1.bf16.msra.mxu0 0
    %781 = vmatprep.subr.bf16.mxu0 0
    %782 = vmatpush1.bf16.msra.mxu0 0
    %783 = vmatprep.subr.bf16.mxu0 0
    %784 = vmatpush1.bf16.msra.mxu0 0
    %785 = vmatprep.subr.bf16.mxu0 0
    %786 = vmatpush1.bf16.msra.mxu0 %v769
    %787 = vmatprep.subr.bf16.mxu0 0
    %788 = vmatpush2.bf16.msra.mxu0 0
    %789 = vmatprep.subr.bf16.mxu0 0
    %790 = vmatpush2.bf16.msra.mxu0 0
    %791 = vmatprep.subr.bf16.mxu0 0
    %792 = vmatpush2.bf16.msra.mxu0 0
    %793 = vmatprep.subr.bf16.mxu0 0
    %794 = vmatpush2.bf16.msra.mxu0 0
    %795 = vmatprep.subr.bf16.mxu0 0
    %796 = vmatpush2.bf16.msra.mxu0 0
    %797 = vmatprep.subr.bf16.mxu0 0
    %798 = vmatpush2.bf16.msra.mxu0 0
    %799 = vmatprep.subr.bf16.mxu0 0
    %800 = vmatpush2.bf16.msra.mxu0 0
    %801 = vmatprep.subr.bf16.mxu0 0
    %802 = vmatpush2.bf16.msra.mxu0 0
    %803 = vmatprep.mubr.bf16.mxu0 0
    %804 = vmatmul.mubr.bf16.gmra.mxu0 %v766
    %v805 = vpop.f32.mrf.mxu0
    %v806 = vadd.f32 0.0, %v805
    %v807 = vpop.f32.mrf.mxu0
    %v808 = vpop.f32.mrf.mxu0
    %v809 = vpop.f32.mrf.mxu0
    %810 = vdwg.mxu0
    %v811 = vpack.c.bf16 %v758, %v758
    %v812 = vpack.c.bf16 %v806, %v806
    %813 = vrot.lane.b32.xlu0 %v144, 80
    %v814 = vpop.permute.xlu0 %813
    %815 = vrot.lane.b32.xlu0 %v144, 16
    %v816 = vpop.permute.xlu0 %815
    %v818 = vsel %vm151, %v814, 0
    %v821 = vsel %vm151, %v816, 0
    %823 = vmatprep.subr.bf16.mxu0 0
    %824 = vmatpush1.bf16.xpose.msra.mxu0 0
    %825 = vmatprep.subr.bf16.mxu0 0
    %826 = vmatpush1.bf16.xpose.msra.mxu0 0
    %827 = vmatprep.subr.bf16.mxu0 0
    %828 = vmatpush1.bf16.xpose.msra.mxu0 0
    %829 = vmatprep.subr.bf16.mxu0 0
    %830 = vmatpush1.bf16.xpose.msra.mxu0 0
    %831 = vmatprep.subr.bf16.mxu0 0
    %832 = vmatpush1.bf16.xpose.msra.mxu0 0
    %833 = vmatprep.subr.bf16.mxu0 0
    %834 = vmatpush1.bf16.xpose.msra.mxu0 0
    %835 = vmatprep.subr.bf16.mxu0 0
    %836 = vmatpush1.bf16.xpose.msra.mxu0 0
    %837 = vmatprep.subr.bf16.mxu0 0
    %838 = vmatpush1.bf16.xpose.msra.mxu0 %v821
    %839 = vmatprep.subr.bf16.mxu0 0
    %840 = vmatpush2.bf16.xpose.msra.mxu0 0
    %841 = vmatprep.subr.bf16.mxu0 0
    %842 = vmatpush2.bf16.xpose.msra.mxu0 0
    %843 = vmatprep.subr.bf16.mxu0 0
    %844 = vmatpush2.bf16.xpose.msra.mxu0 0
    %845 = vmatprep.subr.bf16.mxu0 0
    %846 = vmatpush2.bf16.xpose.msra.mxu0 0
    %847 = vmatprep.subr.bf16.mxu0 0
    %848 = vmatpush2.bf16.xpose.msra.mxu0 0
    %849 = vmatprep.subr.bf16.mxu0 0
    %850 = vmatpush2.bf16.xpose.msra.mxu0 0
    %851 = vmatprep.subr.bf16.mxu0 0
    %852 = vmatpush2.bf16.xpose.msra.mxu0 0
    %853 = vmatprep.subr.bf16.mxu0 0
    %854 = vmatpush2.bf16.xpose.msra.mxu0 0
    %855 = vmatprep.mubr.bf16.mxu0 0
    %856 = vmatmul.mubr.bf16.gmra.mxu0 %v818
    %v857 = vpop.f32.mrf.mxu0
    %v858 = vadd.f32 0.0, %v857
    %v859 = vpop.f32.mrf.mxu0
    %v860 = vpop.f32.mrf.mxu0
    %v861 = vpop.f32.mrf.mxu0
    %862 = vdwg.mxu0
    %863 = vrot.lane.b32.xlu0 %v145, 80
    %v864 = vpop.permute.xlu0 %863
    %865 = vrot.lane.b32.xlu0 %v145, 16
    %v866 = vpop.permute.xlu0 %865
    %v868 = vsel %vm151, %v864, 0
    %v871 = vsel %vm151, %v866, 0
    %873 = vmatprep.subr.bf16.mxu0 0
    %874 = vmatpush1.bf16.xpose.msra.mxu0 0
    %875 = vmatprep.subr.bf16.mxu0 0
    %876 = vmatpush1.bf16.xpose.msra.mxu0 0
    %877 = vmatprep.subr.bf16.mxu0 0
    %878 = vmatpush1.bf16.xpose.msra.mxu0 0
    %879 = vmatprep.subr.bf16.mxu0 0
    %880 = vmatpush1.bf16.xpose.msra.mxu0 0
    %881 = vmatprep.subr.bf16.mxu0 0
    %882 = vmatpush1.bf16.xpose.msra.mxu0 0
    %883 = vmatprep.subr.bf16.mxu0 0
    %884 = vmatpush1.bf16.xpose.msra.mxu0 0
    %885 = vmatprep.subr.bf16.mxu0 0
    %886 = vmatpush1.bf16.xpose.msra.mxu0 0
    %887 = vmatprep.subr.bf16.mxu0 0
    %888 = vmatpush1.bf16.xpose.msra.mxu0 %v871
    %889 = vmatprep.subr.bf16.mxu0 0
    %890 = vmatpush2.bf16.xpose.msra.mxu0 0
    %891 = vmatprep.subr.bf16.mxu0 0
    %892 = vmatpush2.bf16.xpose.msra.mxu0 0
    %893 = vmatprep.subr.bf16.mxu0 0
    %894 = vmatpush2.bf16.xpose.msra.mxu0 0
    %895 = vmatprep.subr.bf16.mxu0 0
    %896 = vmatpush2.bf16.xpose.msra.mxu0 0
    %897 = vmatprep.subr.bf16.mxu0 0
    %898 = vmatpush2.bf16.xpose.msra.mxu0 0
    %899 = vmatprep.subr.bf16.mxu0 0
    %900 = vmatpush2.bf16.xpose.msra.mxu0 0
    %901 = vmatprep.subr.bf16.mxu0 0
    %902 = vmatpush2.bf16.xpose.msra.mxu0 0
    %903 = vmatprep.subr.bf16.mxu0 0
    %904 = vmatpush2.bf16.xpose.msra.mxu0 0
    %905 = vmatprep.mubr.bf16.mxu0 0
    %906 = vmatmul.mubr.bf16.gmra.mxu0 %v868
    %v907 = vpop.f32.mrf.mxu0
    %v908 = vadd.f32 0.0, %v907
    %v909 = vpop.f32.mrf.mxu0
    %v910 = vpop.f32.mrf.mxu0
    %v911 = vpop.f32.mrf.mxu0
    %912 = vdwg.mxu0
    %v913 = vsel %vm247, %v858, -inf
    %914 = vmax.xlane.f32.xlu0 %v913
    %v915 = vpop.xlane.xlu0 %914
    %v916 = vsel %vm247, %v908, -inf
    %917 = vmax.xlane.f32.xlu0 %v916
    %v918 = vpop.xlane.xlu0 %917
    %v919 = vsub.f32 %v858, %v915
    %v920 = vsub.f32 %v908, %v918
    %v921 = vmul.f32 %v919, 1.442695
    %v922 = vpow.pop %v921
    %v923 = vmul.f32 %v920, 1.442695
    %v924 = vpow.pop %v923
    %v925 = vsel %vm247, %v922, 0.0
    %926 = vadd.xlane.f32.xlu0 %v925
    %v927 = vpop.xlane.xlu0 %926
    %v928 = vsel %vm247, %v924, 0.0
    %929 = vadd.xlane.f32.xlu0 %v928
    %v930 = vpop.xlane.xlu0 %929
    %v931 = vrcp.pop %v927
    %v932 = vrcp.pop %v930
    %v933 = vmul.f32 %v922, %v931
    %v934 = vmul.f32 %v924, %v932
    %v935 = vpack.c.bf16 %v933, %v933
    %v936 = vpack.c.bf16 %v934, %v934
    %937 = vrot.lane.b32.xlu0 %v146, 80
    %v938 = vpop.permute.xlu0 %937
    %v940 = vsel %vm247, %v935, 0
    %v943 = vsel %vm275, %v938, 0
    %945 = vmatprep.subr.bf16.mxu0 0
    %946 = vmatpush1.bf16.msra.mxu0 0
    %947 = vmatprep.subr.bf16.mxu0 0
    %948 = vmatpush1.bf16.msra.mxu0 0
    %949 = vmatprep.subr.bf16.mxu0 0
    %950 = vmatpush1.bf16.msra.mxu0 0
    %951 = vmatprep.subr.bf16.mxu0 0
    %952 = vmatpush1.bf16.msra.mxu0 0
    %953 = vmatprep.subr.bf16.mxu0 0
    %954 = vmatpush1.bf16.msra.mxu0 0
    %955 = vmatprep.subr.bf16.mxu0 0
    %956 = vmatpush1.bf16.msra.mxu0 0
    %957 = vmatprep.subr.bf16.mxu0 0
    %958 = vmatpush1.bf16.msra.mxu0 0
    %959 = vmatprep.subr.bf16.mxu0 0
    %960 = vmatpush1.bf16.msra.mxu0 %v943
    %961 = vmatprep.subr.bf16.mxu0 0
    %962 = vmatpush2.bf16.msra.mxu0 0
    %963 = vmatprep.subr.bf16.mxu0 0
    %964 = vmatpush2.bf16.msra.mxu0 0
    %965 = vmatprep.subr.bf16.mxu0 0
    %966 = vmatpush2.bf16.msra.mxu0 0
    %967 = vmatprep.subr.bf16.mxu0 0
    %968 = vmatpush2.bf16.msra.mxu0 0
    %969 = vmatprep.subr.bf16.mxu0 0
    %970 = vmatpush2.bf16.msra.mxu0 0
    %971 = vmatprep.subr.bf16.mxu0 0
    %972 = vmatpush2.bf16.msra.mxu0 0
    %973 = vmatprep.subr.bf16.mxu0 0
    %974 = vmatpush2.bf16.msra.mxu0 0
    %975 = vmatprep.subr.bf16.mxu0 0
    %976 = vmatpush2.bf16.msra.mxu0 0
    %977 = vmatprep.mubr.bf16.mxu0 0
    %978 = vmatmul.mubr.bf16.gmra.mxu0 %v940
    %v979 = vpop.f32.mrf.mxu0
    %v980 = vadd.f32 0.0, %v979
    %v981 = vpop.f32.mrf.mxu0
    %v982 = vpop.f32.mrf.mxu0
    %v983 = vpop.f32.mrf.mxu0
    %984 = vdwg.mxu0
    %985 = vrot.lane.b32.xlu0 %v147, 80
    %v986 = vpop.permute.xlu0 %985
    %v988 = vsel %vm247, %v936, 0
    %v991 = vsel %vm275, %v986, 0
    %993 = vmatprep.subr.bf16.mxu0 0
    %994 = vmatpush1.bf16.msra.mxu0 0
    %995 = vmatprep.subr.bf16.mxu0 0
    %996 = vmatpush1.bf16.msra.mxu0 0
    %997 = vmatprep.subr.bf16.mxu0 0
    %998 = vmatpush1.bf16.msra.mxu0 0
    %999 = vmatprep.subr.bf16.mxu0 0
    %1000 = vmatpush1.bf16.msra.mxu0 0
    %1001 = vmatprep.subr.bf16.mxu0 0
    %1002 = vmatpush1.bf16.msra.mxu0 0
    %1003 = vmatprep.subr.bf16.mxu0 0
    %1004 = vmatpush1.bf16.msra.mxu0 0
    %1005 = vmatprep.subr.bf16.mxu0 0
    %1006 = vmatpush1.bf16.msra.mxu0 0
    %1007 = vmatprep.subr.bf16.mxu0 0
    %1008 = vmatpush1.bf16.msra.mxu0 %v991
    %1009 = vmatprep.subr.bf16.mxu0 0
    %1010 = vmatpush2.bf16.msra.mxu0 0
    %1011 = vmatprep.subr.bf16.mxu0 0
    %1012 = vmatpush2.bf16.msra.mxu0 0
    %1013 = vmatprep.subr.bf16.mxu0 0
    %1014 = vmatpush2.bf16.msra.mxu0 0
    %1015 = vmatprep.subr.bf16.mxu0 0
    %1016 = vmatpush2.bf16.msra.mxu0 0
    %1017 = vmatprep.subr.bf16.mxu0 0
    %1018 = vmatpush2.bf16.msra.mxu0 0
    %1019 = vmatprep.subr.bf16.mxu0 0
    %1020 = vmatpush2.bf16.msra.mxu0 0
    %1021 = vmatprep.subr.bf16.mxu0 0
    %1022 = vmatpush2.bf16.msra.mxu0 0
    %1023 = vmatprep.subr.bf16.mxu0 0
    %1024 = vmatpush2.bf16.msra.mxu0 0
    %1025 = vmatprep.mubr.bf16.mxu0 0
    %1026 = vmatmul.mubr.bf16.gmra.mxu0 %v988
    %v1027 = vpop.f32.mrf.mxu0
    %v1028 = vadd.f32 0.0, %v1027
    %v1029 = vpop.f32.mrf.mxu0
    %v1030 = vpop.f32.mrf.mxu0
    %v1031 = vpop.f32.mrf.mxu0
    %1032 = vdwg.mxu0
    %v1033 = vpack.c.bf16 %v980, %v980
    %v1034 = vpack.c.bf16 %v1028, %v1028
    %1037 = vrot.lane.b32.xlu0 %v589, 16
    %v1038 = vpop.permute.xlu0 %1037
    %1039 = vrot.lane.b32.xlu0 %v590, 16
    %v1040 = vpop.permute.xlu0 %1039
    %1043 = vrot.lane.b32.xlu0 %v811, 32
    %v1044 = vpop.permute.xlu0 %1043
    %1045 = vrot.lane.b32.xlu0 %v812, 32
    %v1046 = vpop.permute.xlu0 %1045
    %1049 = vrot.lane.b32.xlu0 %v1033, 48
    %v1050 = vpop.permute.xlu0 %1049
    %1051 = vrot.lane.b32.xlu0 %v1034, 48
    %v1052 = vpop.permute.xlu0 %1051
    %v1055 = vsel %vm151, %v365, %v1038
    %v1058 = vsel %vm151, %v366, %v1040
    %v1060 = vsel %vm27, %v1055, %v1044
    %v1062 = vsel %vm27, %v1058, %v1046
    %vm1063 = vcmask 392192
    %v1065 = vsel %vm1063, %v1060, %v1050
    %v1067 = vsel %vm1063, %v1062, %v1052
    %v1068 = vld [vmem:[%s4] sm:$0xf]
    %v1069 = vld [vmem:[%s4 + $0x4] sm:$0xf]
    %v1070 = vld [vmem:[%s4 + $0x8] sm:$0xf]
    %v1071 = vld [vmem:[%s4 + $0xc] sm:$0xf]
    %v1072 = vld [vmem:[%s4 + $0x10] sm:$0xf]
    %v1073 = vld [vmem:[%s4 + $0x14] sm:$0xf]
    %v1074 = vld [vmem:[%s4 + $0x18] sm:$0xf]
    %v1075 = vld [vmem:[%s4 + $0x1c] sm:$0xf]
    %v1076 = vld [vmem:[%s5] sm:$0x1]
    %v1078 = vlaneseq
    %v1079 = vshrl.u32 %v1078, 7
    %v1080 = vsub.s32 0, %v1079
    %v1081 = vrot.slane %v1076, %v1080
    %v1085 = vunpack.c.l.b16 %v1065
    %v1086 = vunpack.c.l.b16 %v1067
    %v1087 = vpack.c.b16 %v1086, %v1085
    %v1096 = vunpack.c.l.b16 %v1068
    %v1097 = vunpack.c.l.b16 %v1069
    %v1098 = vunpack.c.l.b16 %v1070
    %v1099 = vunpack.c.l.b16 %v1071
    %v1100 = vunpack.c.l.b16 %v1072
    %v1101 = vunpack.c.l.b16 %v1073
    %v1102 = vunpack.c.l.b16 %v1074
    %v1103 = vunpack.c.l.b16 %v1075
    %v1104 = vpack.c.b16 %v1097, %v1096
    %v1105 = vpack.c.b16 %v1099, %v1098
    %v1106 = vpack.c.b16 %v1101, %v1100
    %v1107 = vpack.c.b16 %v1103, %v1102
    %vm1112 = vcmask 523264
    %v1114 = vsel %vm1112, %v1087, 0
    %1116 = vmatprep.subr.bf16.mxu0 0
    %1117 = vmatpush1.bf16.msra.mxu0 0
    %1118 = vmatprep.subr.bf16.mxu0 0
    %1119 = vmatpush1.bf16.msra.mxu0 0
    %1120 = vmatprep.subr.bf16.mxu0 0
    %1121 = vmatpush1.bf16.msra.mxu0 0
    %1122 = vmatprep.subr.bf16.mxu0 0
    %1123 = vmatpush1.bf16.msra.mxu0 0
    %1124 = vmatprep.subr.bf16.mxu0 0
    %1125 = vmatpush1.bf16.msra.mxu0 %v1107
    %1126 = vmatprep.subr.bf16.mxu0 0
    %1127 = vmatpush1.bf16.msra.mxu0 %v1106
    %1128 = vmatprep.subr.bf16.mxu0 0
    %1129 = vmatpush1.bf16.msra.mxu0 %v1105
    %1130 = vmatprep.subr.bf16.mxu0 0
    %1131 = vmatpush1.bf16.msra.mxu0 %v1104
    %1132 = vmatprep.subr.bf16.mxu0 0
    %1133 = vmatpush2.bf16.msra.mxu0 0
    %1134 = vmatprep.subr.bf16.mxu0 0
    %1135 = vmatpush2.bf16.msra.mxu0 0
    %1136 = vmatprep.subr.bf16.mxu0 0
    %1137 = vmatpush2.bf16.msra.mxu0 0
    %1138 = vmatprep.subr.bf16.mxu0 0
    %1139 = vmatpush2.bf16.msra.mxu0 0
    %1140 = vmatprep.subr.bf16.mxu0 0
    %1141 = vmatpush2.bf16.msra.mxu0 0
    %1142 = vmatprep.subr.bf16.mxu0 0
    %1143 = vmatpush2.bf16.msra.mxu0 0
    %1144 = vmatprep.subr.bf16.mxu0 0
    %1145 = vmatpush2.bf16.msra.mxu0 0
    %1146 = vmatprep.subr.bf16.mxu0 0
    %1147 = vmatpush2.bf16.msra.mxu0 0
    %1148 = vmatprep.mubr.bf16.mxu0 0
    %1149 = vmatmul.mubr.bf16.gmra.mxu0 %v1114
    %v1150 = vpop.f32.mrf.mxu0
    %v1151 = vadd.f32 %v1081, %v1150
    %v1152 = vpop.f32.mrf.mxu0
    %v1153 = vpop.f32.mrf.mxu0
    %v1154 = vadd.f32 %v1081, %v1153
    %v1155 = vpop.f32.mrf.mxu0
    %1156 = vdwg.mxu0
    %1157 = vst.msk [vmem:[#allocation2] sm:$0xff] %vm27, %v1151
    %1158 = vst.msk [vmem:[#allocation2 + $0x8] sm:$0xff] %vm27, %v1154
    // Predicated region
    $region26: #{tpu_custom_call.1} parent=1 // pred_check
      _
    $region27: #{tpu_custom_call.1} parent=1 // pred_check_branch
      %1160 = sbr.rel (0) target = $region29
    $region28: #{tpu_custom_call.1} parent=1 // pred_region
      %s1162 = ssub.s32 256, 256
      %1163 = vsyncadd [#allocation3], %s1162
      %s1164 = sshll.u32 [#allocation2], 4
      %s1165 = int_to_ptr.vmem [resolvable:$true] %s1164
      %1170 = dma.vmem_to_hbm [thread:$0]  %s1165, 256, %s6, [#allocation3], 128, 128, 8
    $region29: #{tpu_custom_call.1} parent=1 // pred_fallthru
      _
    // Predicated region
    $region30: #{tpu_custom_call.1} parent=1 // pred_check
      _
    $region31: #{tpu_custom_call.1} parent=1 // pred_check_branch
      %1172 = sbr.rel (0) target = $region33
    $region32: #{tpu_custom_call.1} parent=1 // pred_region
      %1173 = dma.done [#allocation3], 256
    $region33: #{tpu_custom_call.1} parent=1 // pred_fallthru
      _
    %1174 = vsyncpa [#allocation3], 1

</llo_original>
